<compile_context>
chip_gen: v7x
topology: tpu7x:2x2x1
jax: 0.10.0
libtpu: 0.0.40
codegen_flags: <defaults>
</compile_context>

<pallas_src>
import jax
import jax.numpy as jnp
from jax.experimental import pallas as pl
from jax.experimental.pallas import tpu as pltpu


def _cdiv(a, b):
    return -(-a // b)


def _stochdepth_kernel(x_ref, mask_ref, o_ref):
    # mask_ref is (block_rows, 1): per-row keep bit, broadcast across the
    # lane-dense feature tile (free VPU work; the kernel is HBM-bound).
    o_ref[...] = x_ref[...] * mask_ref[...]


def _choose_blocks(rows, feat, itemsize, *, target_bytes=6 << 20, min_grid_steps=4):
    """Pick a large, TPU-legal 2-D block for a (rows, feat) array.

    Rows first (the small axis for StochDepth: rows = B*M), then grow the
    lane-dense feature axis to fill the byte target.
    """
    # Native sublane multiple for the dtype: 8 (f32), 16 (bf16), 32 (int8/fp8).
    min_rows = 8 * max(1, 4 // itemsize)

    # 1) Row (sublane) axis: full extent if it fits the budget with at least one
    #    128-lane column, else the largest native multiple that does.
    row_budget = max(min_rows, target_bytes // max(1, 128 * itemsize))
    if rows <= row_budget:
        block_rows = rows
    else:
        block_rows = max(min_rows, (row_budget // min_rows) * min_rows)

    # 2) Feature (lane) axis: grow to fill the byte target.  Full extent is
    #    always legal; otherwise round down to a multiple of 128 so output
    #    stores stay unmasked except on the final edge block.
    feat_budget = max(128, target_bytes // max(1, block_rows * itemsize))
    if feat <= feat_budget:
        block_feat = feat
    else:
        block_feat = max(128, (feat_budget // 128) * 128)

    # 3) Degenerate-grid guard: with <4 grid steps the double-buffer pipeline
    #    never overlaps and (on v7x) only one TensorCore gets work.  Split the
    #    innermost feature axis, but never below 512 lanes so tiny tensors keep
    #    their single full block.
    min_block_feat = 512
    while (_cdiv(rows, block_rows) * _cdiv(feat, block_feat) < min_grid_steps
           and block_feat > min_block_feat):
        new_bf = max(min_block_feat, ((block_feat // 2) // 128) * 128)
        if new_bf == block_feat:
            break
        block_feat = new_bf

    return block_rows, block_feat


def stoch_depth(x, rng_key, drop_rate, *, training=True):
    # Layout: x is (B, M, C, H, W) = (batch, model_bs, channels, height, width),
    # matching the PyTorch module.  Kernel operates on the natural 2-D view
    # (B*M, C*H*W): one keep/drop bit per row, broadcast across features.
    if not training:
        return x

    B, M = int(x.shape[0]), int(x.shape[1])
    rows = B * M
    feat = 1
    for d in x.shape[2:]:
        feat *= int(d)
    x2 = x.reshape(rows, feat)
    itemsize = jnp.dtype(x2.dtype).itemsize

    # Mask computed in f32 so keep_prob isn't quantized for bf16/fp8 inputs,
    # then cast once ({0,1} is exact in any dtype).
    # TODO(synk): jax.random.uniform does not reproduce torch.rand bit-for-bit;
    # the distribution (P(keep) = 1 - drop_rate per (batch, model_bs)) matches.
    keep_prob = 1.0 - float(drop_rate)
    rand = jax.random.uniform(rng_key, (rows, 1), dtype=jnp.float32)
    mask = jnp.floor(rand + jnp.float32(keep_prob)).astype(x2.dtype)

    block_rows, block_feat = _choose_blocks(rows, feat, itemsize)
    grid = (_cdiv(rows, block_rows), _cdiv(feat, block_feat))

    out = pl.pallas_call(
        _stochdepth_kernel,
        out_shape=jax.ShapeDtypeStruct((rows, feat), x2.dtype),
        grid=grid,  # feature axis innermost -> mask block index (i, 0) constant, re-DMA elided
        in_specs=[
            pl.BlockSpec((block_rows, block_feat), lambda i, j: (i, j)),  # x tile
            pl.BlockSpec((block_rows, 1), lambda i, j: (i, 0)),           # per-row mask
        ],
        out_specs=pl.BlockSpec((block_rows, block_feat), lambda i, j: (i, j)),
        compiler_params=pltpu.CompilerParams(
            dimension_semantics=("parallel", "parallel"),
            # ~6 MiB blocks, double-buffered x+out ~24 MiB: headroom under
            # v7x's 64 MiB physical VMEM, well under v5e/v6e's 128 MiB.
            vmem_limit_bytes=48 << 20,
        ),
        cost_estimate=pl.CostEstimate(
            flops=rows * feat,
            transcendentals=0,
            bytes_accessed=2 * rows * feat * itemsize + rows * itemsize,
        ),
    )(x2, mask)

    return out.reshape(x.shape)


def _reference(x, rng_key, drop_rate):
    B, M = x.shape[0], x.shape[1]
    rand = jax.random.uniform(rng_key, (B * M, 1), dtype=jnp.float32)
    mask = jnp.floor(rand + jnp.float32(1.0 - drop_rate))
    mask = mask.reshape((B, M) + (1,) * (x.ndim - 2)).astype(x.dtype)
    return x * mask


if __name__ == "__main__":
    key = jax.random.PRNGKey(0)
    kx1, kx2, kd1, kd2 = jax.random.split(key, 4)
    drop_rate = 0.25

    # Test 1: small 5-D f32 input consistent with the module's forward.
    B, M, C, H, W = 2, 3, 4, 8, 8
    x1 = jax.random.normal(kx1, (B, M, C, H, W), dtype=jnp.float32)
    out1 = jax.block_until_ready(stoch_depth(x1, kd1, drop_rate, training=True))
    ref1 = _reference(x1, kd1, drop_rate)
    assert out1.shape == x1.shape and out1.dtype == x1.dtype
    assert jnp.array_equal(out1, ref1)

    # Test 2: larger feature extent (exercises feature-axis grid splitting), bf16.
    B2, M2, C2, H2, W2 = 2, 2, 32, 32, 32
    x2 = jax.random.normal(kx2, (B2, M2, C2, H2, W2), dtype=jnp.bfloat16)
    out2 = jax.block_until_ready(stoch_depth(x2, kd2, drop_rate, training=True))
    ref2 = _reference(x2, kd2, drop_rate)
    assert out2.shape == x2.shape and out2.dtype == x2.dtype
    assert jnp.array_equal(out2, ref2)

    # Eval mode is the identity.
    assert jnp.array_equal(stoch_depth(x1, kd1, drop_rate, training=False), x1)

    print("KERNEL_OK")
</pallas_src>

<mosaic_0001>
module attributes {stable_mosaic.version = 11 : i64} {
  func.func @_stochdepth_kernel(%arg0: i32, %arg1: i32, %arg2: memref<6x256xf32, #tpu.memory_space<vmem>>, %arg3: memref<6x1xf32, #tpu.memory_space<vmem>>, %arg4: memref<6x256xf32, #tpu.memory_space<vmem>>) attributes {dimension_semantics = [#tpu.dimension_semantics<parallel>, #tpu.dimension_semantics<parallel>], iteration_bounds = array<i64: 1, 1>, scalar_prefetch = 0 : i64, scratch_operands = 0 : i64, tpu.core_type = #tpu.core_type<tc>, window_params = [{transform_indices = @transform_0, window_bounds = array<i64: 6, 256>}, {transform_indices = @transform_1, window_bounds = array<i64: 6, 1>}, {transform_indices = @transform_2, window_bounds = array<i64: 6, 256>}]} {
    %c0 = arith.constant 0 : index
    %c0_0 = arith.constant 0 : index
    %0 = vector.load %arg2[%c0, %c0_0] : memref<6x256xf32, #tpu.memory_space<vmem>>, vector<6x256xf32>
    %c0_1 = arith.constant 0 : index
    %c0_2 = arith.constant 0 : index
    %1 = vector.load %arg3[%c0_1, %c0_2] : memref<6x1xf32, #tpu.memory_space<vmem>>, vector<6x1xf32>
    %2 = vector.broadcast %1 : vector<6x1xf32> to vector<6x256xf32>
    %3 = arith.mulf %0, %2 : vector<6x256xf32>
    %c0_3 = arith.constant 0 : index
    %c0_4 = arith.constant 0 : index
    %4 = vector.load %arg4[%c0_3, %c0_4] : memref<6x256xf32, #tpu.memory_space<vmem>>, vector<6x256xf32>
    tpu.vector_store %arg4[%c0_3, %c0_4], %3 {strides = array<i32>} : memref<6x256xf32, #tpu.memory_space<vmem>>, vector<6x256xf32>,
    return
  }
  func.func @transform_0(%arg0: i32, %arg1: i32) -> (i32, i32) {
    %c0_i32 = arith.constant 0 : i32
    return %arg0, %arg1 : i32, i32
  }
  func.func @transform_1(%arg0: i32, %arg1: i32) -> (i32, i32) {
    %c0_i32 = arith.constant 0 : i32
    %c0_i32_0 = arith.constant 0 : i32
    return %arg0, %c0_i32 : i32, i32
  }
  func.func @transform_2(%arg0: i32, %arg1: i32) -> (i32, i32) {
    %c0_i32 = arith.constant 0 : i32
    return %arg0, %arg1 : i32, i32
  }
}

</mosaic_0001>

<llo_original>
// kernel: tpu_custom_call.1
$region0: #{tpu_custom_call.1}
  #allocation0 [shape = 'u32[]', space=smem, size = 0x4, offset = 0x4, fixed_abs, tag = 'smem constant byte address 0x4 - core index']
  #allocation1 [shape = 'u32[144,128]{1,0:T(1,128)}', space=vmem, size = 0x12000, scoped, tag = 'internal scratch']
  %s0 = inlined_call_operand.hbm [shape: f32[6,256], index: 0, kind: input, shape index: {}]
  %s1 = inlined_call_operand.vmem [shape: f32[6,1], index: 1, kind: input, shape index: {}]
  %s2 = inlined_call_operand.hbm [shape: f32[6,256], index: 2, kind: output, shape index: {}]
  %s3 = sld [smem:[#allocation0]]
  $region22: #{tpu_custom_call.1} parent=0
    _
  %s5 = ssub.s32 1, %s3
  %s6 = scalar_select 0, %s5, %s3
  $region1: #{tpu_custom_call.1} parent=0
    #allocation2 [shape = 'u8[8192]{0}', space=vmem, size = 0x2000, scoped, tag = 'input window, operand 0, single buffered']
    #allocation3 [shape = 's32[1]{0}', space=sflag, size = 0x4, scoped, tag = 'scoped memory for tpu_custom_call.1']
    #allocation4 [shape = 's32[1]{0}', space=sflag, size = 0x4, scoped, tag = 'scoped memory for tpu_custom_call.1']
    #allocation5 [shape = 'u8[8192]{0}', space=vmem, size = 0x2000, scoped, tag = 'output window, operand 0, single buffered']
    %7 = vsyncpa [#allocation3], 0
    %8 = vsyncpa [#allocation4], 0
    // Predicated region
    $region2: #{tpu_custom_call.1} parent=1 // pred_check
      _
    $region3: #{tpu_custom_call.1} parent=1 // pred_check_branch
      %10 = sbr.rel (0) target = $region5
    $region4: #{tpu_custom_call.1} parent=1 // pred_region
      %s12 = ssub.s32 256, 256
      %13 = vsyncadd [#allocation3], %s12
      %s15 = sshll.u32 [#allocation2], 4
      %s16 = int_to_ptr.vmem [resolvable:$true] %s15
      %18 = dma.hbm_to_vmem [thread:$0]  %s0, 256, %s16, [#allocation3]
    $region5: #{tpu_custom_call.1} parent=1 // pred_fallthru
      _
    // Predicated region
    $region6: #{tpu_custom_call.1} parent=1 // pred_check
      _
    $region7: #{tpu_custom_call.1} parent=1 // pred_check_branch
      %20 = sbr.rel (0) target = $region9
    $region8: #{tpu_custom_call.1} parent=1 // pred_region
      _
    $region9: #{tpu_custom_call.1} parent=1 // pred_fallthru
      _
    // Predicated region
    $region10: #{tpu_custom_call.1} parent=1 // pred_check
      _
    $region11: #{tpu_custom_call.1} parent=1 // pred_check_branch
      %22 = sbr.rel (0) target = $region13
    $region12: #{tpu_custom_call.1} parent=1 // pred_region
      %23 = dma.done [#allocation3], 256
    $region13: #{tpu_custom_call.1} parent=1 // pred_fallthru
      _
    %v24 = vld [vmem:[#allocation2] sm:$0x3f]
    %v25 = vld [vmem:[#allocation2 + $0x8] sm:$0x3f]
    %v26 = vld [vmem:[%s1] sm:$0x3f]
    %28 = vset.pattern.permute.xlu0 0
    %29 = vperm.xlu0 %28, %v26
    %v30 = vpop.permute.xlu0 %29
    %v32 = vmul.f32 %v24, %v30
    %v33 = vmul.f32 %v25, %v30
    %34 = vst [vmem:[#allocation5] sm:$0x3f] %v32
    %35 = vst [vmem:[#allocation5 + $0x8] sm:$0x3f] %v33
    // Predicated region
    $region14: #{tpu_custom_call.1} parent=1 // pred_check
      _
    $region15: #{tpu_custom_call.1} parent=1 // pred_check_branch
      %37 = sbr.rel (0) target = $region17
    $region16: #{tpu_custom_call.1} parent=1 // pred_region
      %s39 = ssub.s32 256, 256
      %40 = vsyncadd [#allocation4], %s39
      %s42 = sshll.u32 [#allocation5], 4
      %s43 = int_to_ptr.vmem [resolvable:$true] %s42
      %45 = dma.vmem_to_hbm [thread:$0]  %s43, 256, %s2, [#allocation4]
    $region17: #{tpu_custom_call.1} parent=1 // pred_fallthru
      _
    // Predicated region
    $region18: #{tpu_custom_call.1} parent=1 // pred_check
      _
    $region19: #{tpu_custom_call.1} parent=1 // pred_check_branch
      %47 = sbr.rel (0) target = $region21
    $region20: #{tpu_custom_call.1} parent=1 // pred_region
      %48 = dma.done [#allocation4], 256
    $region21: #{tpu_custom_call.1} parent=1 // pred_fallthru
      _
    %49 = vsyncpa [#allocation3], 1
    %50 = vsyncpa [#allocation4], 1

</llo_original>
